<compile_context>
chip_gen: v5e
topology: v5e:2x2
jax: 0.10.0
libtpu: 0.0.40
codegen_flags: <defaults>
</compile_context>

<pallas_src>
import jax
import jax.numpy as jnp
from jax import lax
from jax.experimental import pallas as pl
from jax.experimental.pallas import tpu as pltpu


# ------------------------------- kernel -------------------------------------
def _make_kernel(n_layers, hidden_dim, in_pad):
    """Single-invocation kernel: one LSTM time step through n_layers + heads."""
    H = hidden_dim

    def kernel(x0_ref, ench_ref, w_ref, b_ref, wh_ref, bh_ref, out_ref):
        # x0_ref  : (B, in_pad)           f32   augmented layer-0 input
        # ench_ref: (L, B, H)             f32   encoder hidden (initial h)
        # w_ref   : (L, in_pad + H, 3H)   bf16  [x-block ; h-block] per layer
        # b_ref   : (L, 1, 3H)            f32   gate biases (i, g, o)
        # wh_ref  : (H, A + 1)            bf16  [policy | value] head weights
        # bh_ref  : (1, A + 1)            f32
        # out_ref : (B, A + 1)            f32   [logits | value]
        x = x0_ref[...]                                    # (B, in_pad)
        for l in range(n_layers):                          # fully unrolled
            h_prev = ench_ref[l]                           # (B, H)
            if l > 0 and in_pad > H:
                # zero-pad previous layer's hidden up to in_pad columns so it
                # lines up with the packed weight's x-block.
                x = jnp.concatenate(
                    [x, jnp.zeros((x.shape[0], in_pad - H), x.dtype)], axis=-1)
            xh = jnp.concatenate([x, h_prev], axis=-1)     # (B, in_pad + H)
            z = (jnp.dot(xh.astype(jnp.bfloat16), w_ref[l],
                         preferred_element_type=jnp.float32)
                 + b_ref[l])                               # (B, 3H) f32
            s = jax.nn.sigmoid(z)                          # i / o lanes
            t = jnp.tanh(z)                                # g lanes
            c = s[:, :H] * t[:, H:2 * H]                   # c_prev == 0 exactly
            x = s[:, 2 * H:] * jnp.tanh(c)                 # new hidden

        out_ref[...] = (jnp.dot(x.astype(jnp.bfloat16), wh_ref[...],
                                preferred_element_type=jnp.float32)
                        + bh_ref[...])

    return kernel


# ------------------------- one-time parameter packing ------------------------
def pack_params(params, *, input_dim, action_dim, hidden_dim, n_layers):
    """Pack/transpose/fuse all Decoder weights once, outside the call path."""
    H, L, A = hidden_dim, n_layers, action_dim
    d_ctx = input_dim + action_dim
    d_aug = d_ctx + 1                       # + homogeneous coordinate for b_ce
    in_pad = max(d_aug, H)
    in_pad = ((in_pad + 7) // 8) * 8        # sublane-friendly (cosmetic)
    hp = lax.Precision.HIGHEST              # one-time precompute only
    GATES = (0, 2, 3)                       # (i, g, o) of PyTorch's (i, f, g, o)

    w_ce = params["w_ce"].astype(jnp.float32)          # (H, d_ctx)
    b_ce = params["b_ce"].astype(jnp.float32)          # (H,)

    w_layers, b_layers = [], []
    for l in range(L):
        wih, whh, bih, bhh = [p.astype(jnp.float32) for p in params["lstm"][l]]
        # gate-packed along the last (lane) axis: (in, 3H) / (H, 3H) / (3H,)
        wih_g = jnp.concatenate([wih[g * H:(g + 1) * H].T for g in GATES], -1)
        whh_g = jnp.concatenate([whh[g * H:(g + 1) * H].T for g in GATES], -1)
        b_g = jnp.concatenate([(bih + bhh)[g * H:(g + 1) * H] for g in GATES], -1)
        if l == 0:
            # Fuse context_embed:
            #   (ctx @ Wce^T + bce) @ Wih_g = ctx @ (Wce^T Wih_g) + bce @ Wih_g
            # Homogeneous coordinate: x0 = [ctx, 1, 0-pad] makes the same
            # weight exact for prev_context=None (x0 = zeros -> 0 contribution).
            fused_w = jnp.dot(w_ce.T, wih_g, precision=hp)           # (d_ctx,3H)
            fused_b = jnp.dot(b_ce[None, :], wih_g, precision=hp)    # (1, 3H)
            x_block = jnp.concatenate(
                [fused_w, fused_b,
                 jnp.zeros((in_pad - d_aug, 3 * H), jnp.float32)], axis=0)
        else:
            x_block = jnp.concatenate(
                [wih_g, jnp.zeros((in_pad - H, 3 * H), jnp.float32)], axis=0)
        w_layers.append(jnp.concatenate([x_block, whh_g], axis=0))   # (in_pad+H,3H)
        b_layers.append(b_g.reshape(1, 3 * H))

    w_head = jnp.concatenate([params["w_p"].astype(jnp.float32).T,
                              params["w_v"].astype(jnp.float32).T], axis=-1)
    b_head = jnp.concatenate([params["b_p"], params["b_v"]]
                             ).astype(jnp.float32).reshape(1, A + 1)

    return {
        "w_all": jnp.stack(w_layers, 0).astype(jnp.bfloat16),  # (L, in_pad+H, 3H)
        "b_all": jnp.stack(b_layers, 0),                       # (L, 1, 3H) f32
        "w_head": w_head.astype(jnp.bfloat16),                 # (H, A+1)
        "b_head": b_head,                                      # (1, A+1) f32
        "in_pad": in_pad, "d_ctx": d_ctx,
        "hidden_dim": H, "n_layers": L, "action_dim": A,
    }


# ------------------------------- wrapper ------------------------------------
def decoder_act(encoder_hidden, prev_context, packed):
    """encoder_hidden: (L, B, H); prev_context: (B, input_dim+action_dim) or None.

    Returns (action_logits (B, A), value (B, 1))."""
    H = packed["hidden_dim"]
    L = packed["n_layers"]
    A = packed["action_dim"]
    in_pad = packed["in_pad"]
    d_aug = packed["d_ctx"] + 1
    B = encoder_hidden.shape[1]

    if prev_context is None:
        x0 = jnp.zeros((B, in_pad), jnp.float32)
    else:
        pieces = [prev_context.astype(jnp.float32), jnp.ones((B, 1), jnp.float32)]
        if in_pad > d_aug:
            pieces.append(jnp.zeros((B, in_pad - d_aug), jnp.float32))
        x0 = jnp.concatenate(pieces, axis=-1)              # (B, in_pad)

    vmem = pl.BlockSpec(memory_space=pltpu.MemorySpace.VMEM)
    out = pl.pallas_call(
        _make_kernel(L, H, in_pad),
        out_shape=jax.ShapeDtypeStruct((B, A + 1), jnp.float32),
        in_specs=[vmem] * 6,
        out_specs=vmem,
    )(x0, encoder_hidden.astype(jnp.float32),
      packed["w_all"], packed["b_all"], packed["w_head"], packed["b_head"])

    return out[:, :A], out[:, A:]


# ----------------------------- reference (pure JAX) --------------------------
def reference_act(encoder_hidden, prev_context, params, *, n_layers, hidden_dim):
    H = hidden_dim
    hp = lax.Precision.HIGHEST
    B = encoder_hidden.shape[1]
    if prev_context is None:
        x = jnp.zeros((B, H), jnp.float32)
    else:
        x = jnp.dot(prev_context, params["w_ce"].T, precision=hp) + params["b_ce"]
    h = None
    for l in range(n_layers):
        wih, whh, bih, bhh = params["lstm"][l]
        h_prev = encoder_hidden[l]
        c_prev = jnp.zeros_like(h_prev)
        g = (jnp.dot(x, wih.T, precision=hp)
             + jnp.dot(h_prev, whh.T, precision=hp) + bih + bhh)
        i_g = jax.nn.sigmoid(g[:, 0 * H:1 * H])
        f_g = jax.nn.sigmoid(g[:, 1 * H:2 * H])
        g_g = jnp.tanh(g[:, 2 * H:3 * H])
        o_g = jax.nn.sigmoid(g[:, 3 * H:4 * H])
        c = f_g * c_prev + i_g * g_g
        h = o_g * jnp.tanh(c)
        x = h
    logits = jnp.dot(h, params["w_p"].T, precision=hp) + params["b_p"]
    value = jnp.dot(h, params["w_v"].T, precision=hp) + params["b_v"]
    return logits, value


# ----------------------------- parameter init --------------------------------
def init_params(key, input_dim, action_dim, hidden_dim, n_layers):
    d_ctx = input_dim + action_dim
    ks = jax.random.split(key, 6 + 4 * n_layers)

    def u(k, shape, fan_in):
        bound = fan_in ** -0.5
        return jax.random.uniform(k, shape, jnp.float32, -bound, bound)

    params = {
        "w_ce": u(ks[0], (hidden_dim, d_ctx), d_ctx),            # context_embed
        "b_ce": u(ks[1], (hidden_dim,), d_ctx),
        "w_p": u(ks[2], (action_dim, hidden_dim), hidden_dim),   # policy_head
        "b_p": u(ks[3], (action_dim,), hidden_dim),
        "w_v": u(ks[4], (1, hidden_dim), hidden_dim),            # value_head
        "b_v": u(ks[5], (1,), hidden_dim),
        "lstm": [],
    }
    for l in range(n_layers):
        kk = ks[6 + 4 * l: 6 + 4 * (l + 1)]
        params["lstm"].append((
            u(kk[0], (4 * hidden_dim, hidden_dim), hidden_dim),   # weight_ih
            u(kk[1], (4 * hidden_dim, hidden_dim), hidden_dim),   # weight_hh
            u(kk[2], (4 * hidden_dim,), hidden_dim),              # bias_ih
            u(kk[3], (4 * hidden_dim,), hidden_dim),              # bias_hh
        ))
    return params


if __name__ == "__main__":
    config = dict(input_dim=16, action_dim=6, hidden_dim=32, n_layers=2)
    B = 4
    D_ctx = config["input_dim"] + config["action_dim"]

    key = jax.random.PRNGKey(0)
    k_h, k_ctx, k_par = jax.random.split(key, 3)
    encoder_hidden = jax.random.normal(
        k_h, (config["n_layers"], B, config["hidden_dim"]), jnp.float32)
    prev_context = jax.random.normal(k_ctx, (B, D_ctx), jnp.float32)
    params = init_params(k_par, config["input_dim"], config["action_dim"],
                         config["hidden_dim"], config["n_layers"])

    # One-time packing, hoisted out of the per-call path.
    packed = pack_params(params, **config)
    jax.block_until_ready(packed["w_all"])

    # Kernel matmuls use bf16 weights/operands with f32 accumulation; compare
    # against the HIGHEST-precision f32 reference with a relaxed tolerance.
    TOL = dict(atol=2e-2, rtol=2e-2)

    # --- case 1: prev_context provided (exercises fused context_embed) ------
    logits, value = decoder_act(encoder_hidden, prev_context, packed)
    jax.block_until_ready((logits, value))
    l_ref, v_ref = reference_act(encoder_hidden, prev_context, params,
                                 n_layers=config["n_layers"],
                                 hidden_dim=config["hidden_dim"])
    assert logits.shape == (B, config["action_dim"])
    assert value.shape == (B, 1)
    assert jnp.allclose(logits, l_ref, **TOL), "action_logits mismatch (ctx)"
    assert jnp.allclose(value, v_ref, **TOL), "value mismatch (ctx)"

    # --- case 2: prev_context is None (zero decoder input) ------------------
    logits0, value0 = decoder_act(encoder_hidden, None, packed)
    jax.block_until_ready((logits0, value0))
    l0_ref, v0_ref = reference_act(encoder_hidden, None, params,
                                   n_layers=config["n_layers"],
                                   hidden_dim=config["hidden_dim"])
    assert jnp.allclose(logits0, l0_ref, **TOL), "action_logits mismatch (None)"
    assert jnp.allclose(value0, v0_ref, **TOL), "value mismatch (None)"

    print("KERNEL_OK")
</pallas_src>

<mosaic_0001>
module attributes {stable_mosaic.version = 11 : i64} {
  func.func @kernel(%arg0: memref<4x32xf32, #tpu.memory_space<vmem>>, %arg1: memref<2x4x32xf32, #tpu.memory_space<vmem>>, %arg2: memref<2x64x96xbf16, #tpu.memory_space<vmem>>, %arg3: memref<2x1x96xf32, #tpu.memory_space<vmem>>, %arg4: memref<32x7xbf16, #tpu.memory_space<vmem>>, %arg5: memref<1x7xf32, #tpu.memory_space<vmem>>, %arg6: memref<4x7xf32, #tpu.memory_space<vmem>>) attributes {dimension_semantics = [], scalar_prefetch = 0 : i64, scratch_operands = 0 : i64, tpu.core_type = #tpu.core_type<tc>} {
    %c0 = arith.constant 0 : index
    %c0_0 = arith.constant 0 : index
    %0 = vector.load %arg0[%c0, %c0_0] : memref<4x32xf32, #tpu.memory_space<vmem>>, vector<4x32xf32>
    %c0_1 = arith.constant 0 : index
    %c0_2 = arith.constant 0 : index
    %c0_3 = arith.constant 0 : index
    %1 = vector.load %arg1[%c0_1, %c0_2, %c0_3] : memref<2x4x32xf32, #tpu.memory_space<vmem>>, vector<1x4x32xf32>
    %2 = vector.shape_cast %1 : vector<1x4x32xf32> to vector<4x32xf32>
    %3 = tpu.concatenate %0, %2 in 1 : vector<4x32xf32>, vector<4x32xf32> -> vector<4x64xf32>
    %4 = arith.truncf %3 : vector<4x64xf32> to vector<4x64xbf16>
    %c0_4 = arith.constant 0 : index
    %c0_5 = arith.constant 0 : index
    %c0_6 = arith.constant 0 : index
    %5 = vector.load %arg2[%c0_4, %c0_5, %c0_6] : memref<2x64x96xbf16, #tpu.memory_space<vmem>>, vector<1x64x96xbf16>
    %6 = vector.shape_cast %5 : vector<1x64x96xbf16> to vector<64x96xbf16>
    %cst = arith.constant dense<0.000000e+00> : vector<4x96xf32>
    %7 = tpu.matmul %4, %6, %cst {dimension_numbers = #tpu.dot_dimension_numbers<[1], [0], [0], [1], [0, 0, 1, 1], [], []>} : vector<4x64xbf16>, vector<64x96xbf16>, vector<4x96xf32> -> vector<4x96xf32>
    %c0_7 = arith.constant 0 : index
    %c0_8 = arith.constant 0 : index
    %c0_9 = arith.constant 0 : index
    %8 = vector.load %arg3[%c0_7, %c0_8, %c0_9] : memref<2x1x96xf32, #tpu.memory_space<vmem>>, vector<1x1x96xf32>
    %9 = vector.shape_cast %8 : vector<1x1x96xf32> to vector<1x96xf32>
    %10 = vector.broadcast %9 : vector<1x96xf32> to vector<4x96xf32>
    %11 = arith.addf %7, %10 : vector<4x96xf32>
    %12 = arith.negf %11 : vector<4x96xf32>
    %13 = math.exp %12 : vector<4x96xf32>
    %cst_10 = arith.constant 1.000000e+00 : f32
    %14 = vector.broadcast %cst_10 : f32 to vector<4x96xf32>
    %15 = arith.addf %14, %13 : vector<4x96xf32>
    %16 = arith.divf %14, %15 : vector<4x96xf32>
    %17 = math.tanh %11 : vector<4x96xf32>
    %18 = vector.extract_strided_slice %16 {offsets = [0, 0], sizes = [4, 32], strides = [1, 1]} : vector<4x96xf32> to vector<4x32xf32>
    %19 = vector.extract_strided_slice %17 {offsets = [0, 32], sizes = [4, 32], strides = [1, 1]} : vector<4x96xf32> to vector<4x32xf32>
    %20 = arith.mulf %18, %19 : vector<4x32xf32>
    %21 = vector.extract_strided_slice %16 {offsets = [0, 64], sizes = [4, 32], strides = [1, 1]} : vector<4x96xf32> to vector<4x32xf32>
    %22 = math.tanh %20 : vector<4x32xf32>
    %23 = arith.mulf %21, %22 : vector<4x32xf32>
    %c1 = arith.constant 1 : index
    %c0_11 = arith.constant 0 : index
    %c0_12 = arith.constant 0 : index
    %24 = vector.load %arg1[%c1, %c0_11, %c0_12] : memref<2x4x32xf32, #tpu.memory_space<vmem>>, vector<1x4x32xf32>
    %25 = vector.shape_cast %24 : vector<1x4x32xf32> to vector<4x32xf32>
    %26 = tpu.concatenate %23, %25 in 1 : vector<4x32xf32>, vector<4x32xf32> -> vector<4x64xf32>
    %27 = arith.truncf %26 : vector<4x64xf32> to vector<4x64xbf16>
    %c1_13 = arith.constant 1 : index
    %c0_14 = arith.constant 0 : index
    %c0_15 = arith.constant 0 : index
    %28 = vector.load %arg2[%c1_13, %c0_14, %c0_15] : memref<2x64x96xbf16, #tpu.memory_space<vmem>>, vector<1x64x96xbf16>
    %29 = vector.shape_cast %28 : vector<1x64x96xbf16> to vector<64x96xbf16>
    %cst_16 = arith.constant dense<0.000000e+00> : vector<4x96xf32>
    %30 = tpu.matmul %27, %29, %cst_16 {dimension_numbers = #tpu.dot_dimension_numbers<[1], [0], [0], [1], [0, 0, 1, 1], [], []>} : vector<4x64xbf16>, vector<64x96xbf16>, vector<4x96xf32> -> vector<4x96xf32>
    %c1_17 = arith.constant 1 : index
    %c0_18 = arith.constant 0 : index
    %c0_19 = arith.constant 0 : index
    %31 = vector.load %arg3[%c1_17, %c0_18, %c0_19] : memref<2x1x96xf32, #tpu.memory_space<vmem>>, vector<1x1x96xf32>
    %32 = vector.shape_cast %31 : vector<1x1x96xf32> to vector<1x96xf32>
    %33 = vector.broadcast %32 : vector<1x96xf32> to vector<4x96xf32>
    %34 = arith.addf %30, %33 : vector<4x96xf32>
    %35 = arith.negf %34 : vector<4x96xf32>
    %36 = math.exp %35 : vector<4x96xf32>
    %cst_20 = arith.constant 1.000000e+00 : f32
    %37 = vector.broadcast %cst_20 : f32 to vector<4x96xf32>
    %38 = arith.addf %37, %36 : vector<4x96xf32>
    %39 = arith.divf %37, %38 : vector<4x96xf32>
    %40 = math.tanh %34 : vector<4x96xf32>
    %41 = vector.extract_strided_slice %39 {offsets = [0, 0], sizes = [4, 32], strides = [1, 1]} : vector<4x96xf32> to vector<4x32xf32>
    %42 = vector.extract_strided_slice %40 {offsets = [0, 32], sizes = [4, 32], strides = [1, 1]} : vector<4x96xf32> to vector<4x32xf32>
    %43 = arith.mulf %41, %42 : vector<4x32xf32>
    %44 = vector.extract_strided_slice %39 {offsets = [0, 64], sizes = [4, 32], strides = [1, 1]} : vector<4x96xf32> to vector<4x32xf32>
    %45 = math.tanh %43 : vector<4x32xf32>
    %46 = arith.mulf %44, %45 : vector<4x32xf32>
    %47 = arith.truncf %46 : vector<4x32xf32> to vector<4x32xbf16>
    %c0_21 = arith.constant 0 : index
    %c0_22 = arith.constant 0 : index
    %48 = vector.load %arg4[%c0_21, %c0_22] : memref<32x7xbf16, #tpu.memory_space<vmem>>, vector<32x7xbf16>
    %cst_23 = arith.constant dense<0.000000e+00> : vector<4x7xf32>
    %49 = tpu.matmul %47, %48, %cst_23 {dimension_numbers = #tpu.dot_dimension_numbers<[1], [0], [0], [1], [0, 0, 1, 1], [], []>} : vector<4x32xbf16>, vector<32x7xbf16>, vector<4x7xf32> -> vector<4x7xf32>
    %c0_24 = arith.constant 0 : index
    %c0_25 = arith.constant 0 : index
    %50 = vector.load %arg5[%c0_24, %c0_25] : memref<1x7xf32, #tpu.memory_space<vmem>>, vector<1x7xf32>
    %51 = vector.broadcast %50 : vector<1x7xf32> to vector<4x7xf32>
    %52 = arith.addf %49, %51 : vector<4x7xf32>
    %c0_26 = arith.constant 0 : index
    %c0_27 = arith.constant 0 : index
    %53 = vector.load %arg6[%c0_26, %c0_27] : memref<4x7xf32, #tpu.memory_space<vmem>>, vector<4x7xf32>
    tpu.vector_store %arg6[%c0_26, %c0_27], %52 {strides = array<i32>} : memref<4x7xf32, #tpu.memory_space<vmem>>, vector<4x7xf32>,
    return
  }
}

</mosaic_0001>

<llo_original>
// kernel: tpu_custom_call.1
$region0: #{tpu_custom_call.1}
  #allocation0 [shape = 'u32[]', space=smem, size = 0x4, offset = 0x4, fixed_abs, tag = 'smem constant byte address 0x4 - core index']
  #allocation1 [shape = 'u32[72,128]{1,0:T(1,128)}', space=vmem, size = 0x9000, scoped, tag = 'internal scratch']
  %s0 = inlined_call_operand.vmem [shape: f32[4,32], index: 0, kind: input, shape index: {}]
  %s1 = inlined_call_operand.vmem [shape: f32[2,4,32], index: 1, kind: input, shape index: {}]
  %s2 = inlined_call_operand.hbm [shape: bf16[2,64,96], index: 2, kind: input, shape index: {}]
  %s3 = inlined_call_operand.vmem [shape: f32[2,1,96], index: 3, kind: input, shape index: {}]
  %s4 = inlined_call_operand.vmem [shape: bf16[32,7], index: 4, kind: input, shape index: {}]
  %s5 = inlined_call_operand.vmem [shape: f32[1,7], index: 5, kind: input, shape index: {}]
  %s6 = inlined_call_operand.hbm [shape: f32[4,7], index: 6, kind: output, shape index: {}]
  %s7 = sld [smem:[#allocation0]]
  $region38: #{tpu_custom_call.1} parent=0
    _
  %s9 = ssub.s32 1, %s7
  %s10 = scalar_select 0, %s9, %s7
  $region1: #{tpu_custom_call.1} parent=0
    #allocation2 [shape = 'u8[32768]{0}', space=vmem, size = 0x8000, scoped, tag = 'input window, operand 2, single buffered']
    #allocation3 [shape = 's32[1]{0}', space=sflag, size = 0x4, scoped, tag = 'scoped memory for tpu_custom_call.1']
    #allocation4 [shape = 's32[1]{0}', space=sflag, size = 0x4, scoped, tag = 'scoped memory for tpu_custom_call.1']
    #allocation5 [shape = 'u8[2048]{0}', space=vmem, size = 0x800, scoped, tag = 'output window, operand 0, single buffered']
    %11 = vsyncpa [#allocation3], 0
    %12 = vsyncpa [#allocation4], 0
    // Predicated region
    $region2: #{tpu_custom_call.1} parent=1 // pred_check
      _
    $region3: #{tpu_custom_call.1} parent=1 // pred_check_branch
      %14 = sbr.rel (0) target = $region5
    $region4: #{tpu_custom_call.1} parent=1 // pred_region
      _
    $region5: #{tpu_custom_call.1} parent=1 // pred_fallthru
      _
    // Predicated region
    $region6: #{tpu_custom_call.1} parent=1 // pred_check
      _
    $region7: #{tpu_custom_call.1} parent=1 // pred_check_branch
      %16 = sbr.rel (0) target = $region9
    $region8: #{tpu_custom_call.1} parent=1 // pred_region
      _
    $region9: #{tpu_custom_call.1} parent=1 // pred_fallthru
      _
    // Predicated region
    $region10: #{tpu_custom_call.1} parent=1 // pred_check
      _
    $region11: #{tpu_custom_call.1} parent=1 // pred_check_branch
      %18 = sbr.rel (0) target = $region13
    $region12: #{tpu_custom_call.1} parent=1 // pred_region
      %20 = vsyncadd [#allocation3], 0
      %s21 = sshll.u32 %s2, 4
      %s22 = int_to_ptr.hbm [resolvable:$true] %s21
      %s23 = sshll.u32 [#allocation2], 4
      %s24 = int_to_ptr.vmem [resolvable:$true] %s23
      %29 = dma.hbm_to_vmem [thread:$0]  %s22, 1024, %s24, [#allocation3], 64, 64, 4
    $region13: #{tpu_custom_call.1} parent=1 // pred_fallthru
      _
    // Predicated region
    $region14: #{tpu_custom_call.1} parent=1 // pred_check
      _
    $region15: #{tpu_custom_call.1} parent=1 // pred_check_branch
      %31 = sbr.rel (0) target = $region17
    $region16: #{tpu_custom_call.1} parent=1 // pred_region
      _
    $region17: #{tpu_custom_call.1} parent=1 // pred_fallthru
      _
    // Predicated region
    $region18: #{tpu_custom_call.1} parent=1 // pred_check
      _
    $region19: #{tpu_custom_call.1} parent=1 // pred_check_branch
      %33 = sbr.rel (0) target = $region21
    $region20: #{tpu_custom_call.1} parent=1 // pred_region
      _
    $region21: #{tpu_custom_call.1} parent=1 // pred_fallthru
      _
    // Predicated region
    $region22: #{tpu_custom_call.1} parent=1 // pred_check
      _
    $region23: #{tpu_custom_call.1} parent=1 // pred_check_branch
      %35 = sbr.rel (0) target = $region25
    $region24: #{tpu_custom_call.1} parent=1 // pred_region
      _
    $region25: #{tpu_custom_call.1} parent=1 // pred_fallthru
      _
    // Predicated region
    $region26: #{tpu_custom_call.1} parent=1 // pred_check
      _
    $region27: #{tpu_custom_call.1} parent=1 // pred_check_branch
      %37 = sbr.rel (0) target = $region29
    $region28: #{tpu_custom_call.1} parent=1 // pred_region
      %39 = dma.done [#allocation3], 1024
    $region29: #{tpu_custom_call.1} parent=1 // pred_fallthru
      _
    %v41 = vld [vmem:[%s0] sm:$0xf]
    %v42 = vld [vmem:[%s1] sm:$0xf]
    %44 = vrot.lane.b32.xlu0 %v42, 32
    %v45 = vpop.permute.xlu0 %44
    %vm47 = vcmask 261120
    %v48 = vsel %vm47, %v41, %v45
    %v49 = vpack.c.bf16 %v48, %v48
    %v50 = vld [vmem:[#allocation2] sm:$0xf]
    %v51 = vld [vmem:[#allocation2 + $0x4] sm:$0xf]
    %v52 = vld [vmem:[#allocation2 + $0x8] sm:$0xf]
    %v53 = vld [vmem:[#allocation2 + $0xc] sm:$0xf]
    %v54 = vld [vmem:[#allocation2 + $0x10] sm:$0xf]
    %v55 = vld [vmem:[#allocation2 + $0x14] sm:$0xf]
    %v56 = vld [vmem:[#allocation2 + $0x18] sm:$0xf]
    %v57 = vld [vmem:[#allocation2 + $0x1c] sm:$0xf]
    %v58 = vld [vmem:[%s3] sm:$0x1]
    %v60 = vperm.slane %v58, 0
    %v70 = vunpack.c.l.b16 %v50
    %v71 = vunpack.c.l.b16 %v51
    %v72 = vunpack.c.l.b16 %v52
    %v73 = vunpack.c.l.b16 %v53
    %v74 = vunpack.c.l.b16 %v54
    %v75 = vunpack.c.l.b16 %v55
    %v76 = vunpack.c.l.b16 %v56
    %v77 = vunpack.c.l.b16 %v57
    %v78 = vpack.c.b16 %v71, %v70
    %v79 = vpack.c.b16 %v73, %v72
    %v80 = vpack.c.b16 %v75, %v74
    %v81 = vpack.c.b16 %v77, %v76
    %vm86 = vcmask 523264
    %v88 = vsel %vm86, %v49, 0
    %90 = vmatpush.bf16.msra.mxu0 0
    %91 = vmatpush.bf16.msra.mxu0 0
    %92 = vmatpush.bf16.msra.mxu0 0
    %93 = vmatpush.bf16.msra.mxu0 0
    %94 = vmatpush.bf16.msra.mxu0 %v81
    %95 = vmatpush.bf16.msra.mxu0 %v80
    %96 = vmatpush.bf16.msra.mxu0 %v79
    %97 = vmatpush.bf16.msra.mxu0 %v78
    %98 = vmatmul.bf16.gmra.mxu0 %v88
    %v99 = vpop.f32.mrf.mxu0
    %v100 = vadd.f32 %v60, %v99
    %v101 = vpop.f32.mrf.mxu0
    %102 = vdwg.mxu0
    %v103 = vxor.u32 %v100, 2147483648
    %v104 = vmul.f32 %v103, 1.442695
    %v105 = vpow.pop %v104
    %v106 = vadd.f32 %v105, 1.0
    %v107 = vrcp.pop %v106
    %v108 = vmul.f32 %v106, %v107
    %v109 = vsub.f32 1.0, %v108
    %v110 = vmul.f32 %v107, %v109
    %v111 = vadd.f32 %v107, %v110
    %vm112 = vweird.f32 %v106
    %vm113 = vweird.f32 %v107
    %vm114 = vmor %vm112, %vm113
    %v115 = vsel %vm114, %v107, %v111
    %v116 = vand.u32 2147483647, %v106
    %vm117 = vcmp.eq.f32.partialorder %v116, 8.507059e+37
    %v118 = vand.u32 %v106, 2147483648
    %v119 = vor.u32 1.1754944e-38, %v118
    %v120 = vsel %vm117, %v119, %v115
    %v121 = vmul.f32 1.0, %v120
    %v122 = vtanh.pop %v100
    %124 = vrot.lane.b32.xlu0 %v122, 96
    %v125 = vpop.permute.xlu0 %124
    %v127 = vmul.f32 %v121, %v125
    %v128 = vtanh.pop %v127
    %130 = vrot.lane.b32.xlu0 %v128, 64
    %v131 = vpop.permute.xlu0 %130
    %v133 = vmul.f32 %v121, %v131
    %s134 = scalar_lea.vmem %s1, 4
    %v135 = vld [vmem:[%s134] sm:$0xf]
    %137 = vrot.lane.b32.xlu0 %v133, 64
    %v138 = vpop.permute.xlu0 %137
    %141 = vrot.lane.b32.xlu0 %v135, 32
    %v142 = vpop.permute.xlu0 %141
    %v144 = vsel %vm47, %v138, %v142
    %v145 = vpack.c.bf16 %v144, %v144
    %s146 = scalar_lea.vmem [#allocation2], 32
    %v147 = vld [vmem:[%s146] sm:$0xf]
    %v148 = vld [vmem:[%s146 + $0x4] sm:$0xf]
    %v149 = vld [vmem:[%s146 + $0x8] sm:$0xf]
    %v150 = vld [vmem:[%s146 + $0xc] sm:$0xf]
    %v151 = vld [vmem:[%s146 + $0x10] sm:$0xf]
    %v152 = vld [vmem:[%s146 + $0x14] sm:$0xf]
    %v153 = vld [vmem:[%s146 + $0x18] sm:$0xf]
    %v154 = vld [vmem:[%s146 + $0x1c] sm:$0xf]
    %s155 = scalar_lea.vmem %s3, 1
    %v156 = vld [vmem:[%s155] sm:$0x1]
    %v158 = vperm.slane %v156, 0
    %v168 = vunpack.c.l.b16 %v147
    %v169 = vunpack.c.l.b16 %v148
    %v170 = vunpack.c.l.b16 %v149
    %v171 = vunpack.c.l.b16 %v150
    %v172 = vunpack.c.l.b16 %v151
    %v173 = vunpack.c.l.b16 %v152
    %v174 = vunpack.c.l.b16 %v153
    %v175 = vunpack.c.l.b16 %v154
    %v176 = vpack.c.b16 %v169, %v168
    %v177 = vpack.c.b16 %v171, %v170
    %v178 = vpack.c.b16 %v173, %v172
    %v179 = vpack.c.b16 %v175, %v174
    %v185 = vsel %vm86, %v145, 0
    %187 = vmatpush.bf16.msra.mxu0 0
    %188 = vmatpush.bf16.msra.mxu0 0
    %189 = vmatpush.bf16.msra.mxu0 0
    %190 = vmatpush.bf16.msra.mxu0 0
    %191 = vmatpush.bf16.msra.mxu0 %v179
    %192 = vmatpush.bf16.msra.mxu0 %v178
    %193 = vmatpush.bf16.msra.mxu0 %v177
    %194 = vmatpush.bf16.msra.mxu0 %v176
    %195 = vmatmul.bf16.gmra.mxu0 %v185
    %v196 = vpop.f32.mrf.mxu0
    %v197 = vadd.f32 %v158, %v196
    %v198 = vpop.f32.mrf.mxu0
    %199 = vdwg.mxu0
    %v200 = vxor.u32 %v197, 2147483648
    %v201 = vmul.f32 %v200, 1.442695
    %v202 = vpow.pop %v201
    %v203 = vadd.f32 %v202, 1.0
    %v204 = vrcp.pop %v203
    %v205 = vmul.f32 %v203, %v204
    %v206 = vsub.f32 1.0, %v205
    %v207 = vmul.f32 %v204, %v206
    %v208 = vadd.f32 %v204, %v207
    %vm209 = vweird.f32 %v203
    %vm210 = vweird.f32 %v204
    %vm211 = vmor %vm209, %vm210
    %v212 = vsel %vm211, %v204, %v208
    %v213 = vand.u32 2147483647, %v203
    %vm214 = vcmp.eq.f32.partialorder %v213, 8.507059e+37
    %v215 = vand.u32 %v203, 2147483648
    %v216 = vor.u32 1.1754944e-38, %v215
    %v217 = vsel %vm214, %v216, %v212
    %v218 = vmul.f32 1.0, %v217
    %v219 = vtanh.pop %v197
    %221 = vrot.lane.b32.xlu0 %v219, 96
    %v222 = vpop.permute.xlu0 %221
    %v224 = vmul.f32 %v218, %v222
    %v225 = vtanh.pop %v224
    %227 = vrot.lane.b32.xlu0 %v225, 64
    %v228 = vpop.permute.xlu0 %227
    %v230 = vmul.f32 %v218, %v228
    %v231 = vpack.c.bf16 %v230, %v230
    %v232 = vld [vmem:[%s4] sm:$0xf]
    %v233 = vld [vmem:[%s4 + $0x4] sm:$0xf]
    %v234 = vld [vmem:[%s4 + $0x8] sm:$0xf]
    %v235 = vld [vmem:[%s4 + $0xc] sm:$0xf]
    %v236 = vld [vmem:[%s5] sm:$0x1]
    %v238 = vperm.slane %v236, 0
    %241 = vrot.lane.b32.xlu0 %v231, 64
    %v242 = vpop.permute.xlu0 %241
    %v247 = vunpack.c.l.b16 %v232
    %v248 = vunpack.c.l.b16 %v233
    %v249 = vunpack.c.l.b16 %v234
    %v250 = vunpack.c.l.b16 %v235
    %v251 = vpack.c.b16 %v248, %v247
    %v252 = vpack.c.b16 %v250, %v249
    %v256 = vsel %vm47, %v242, 0
    %258 = vmatpush.bf16.msra.mxu0 0
    %259 = vmatpush.bf16.msra.mxu0 0
    %260 = vmatpush.bf16.msra.mxu0 0
    %261 = vmatpush.bf16.msra.mxu0 0
    %262 = vmatpush.bf16.msra.mxu0 0
    %263 = vmatpush.bf16.msra.mxu0 0
    %264 = vmatpush.bf16.msra.mxu0 %v252
    %265 = vmatpush.bf16.msra.mxu0 %v251
    %266 = vmatmul.bf16.gmra.mxu0 %v256
    %v267 = vpop.f32.mrf.mxu0
    %v268 = vadd.f32 %v238, %v267
    %v269 = vpop.f32.mrf.mxu0
    %270 = vdwg.mxu0
    %vm271 = vcmask 52224
    %272 = vst.msk [vmem:[#allocation5] sm:$0xf] %vm271, %v268
    // Predicated region
    $region30: #{tpu_custom_call.1} parent=1 // pred_check
      _
    $region31: #{tpu_custom_call.1} parent=1 // pred_check_branch
      %274 = sbr.rel (0) target = $region33
    $region32: #{tpu_custom_call.1} parent=1 // pred_region
      %276 = vsyncadd [#allocation4], 0
      %s278 = sshll.u32 [#allocation5], 4
      %s279 = int_to_ptr.vmem [resolvable:$true] %s278
      %s280 = sshll.u32 %s6, 4
      %s281 = int_to_ptr.hbm [resolvable:$true] %s280
      %283 = dma.vmem_to_hbm [thread:$0]  %s279, 64, %s281, [#allocation4]
    $region33: #{tpu_custom_call.1} parent=1 // pred_fallthru
      _
    // Predicated region
    $region34: #{tpu_custom_call.1} parent=1 // pred_check
      _
    $region35: #{tpu_custom_call.1} parent=1 // pred_check_branch
      %285 = sbr.rel (0) target = $region37
    $region36: #{tpu_custom_call.1} parent=1 // pred_region
      %287 = dma.done [#allocation4], 64
    $region37: #{tpu_custom_call.1} parent=1 // pred_fallthru
      _
    %288 = vsyncpa [#allocation3], 1
    %289 = vsyncpa [#allocation4], 1

</llo_original>
